<compile_context>
chip_gen: v7x
topology: tpu7x:2x2x1
jax: 0.10.0
libtpu: 0.0.40
codegen_flags: <defaults>
</compile_context>

<pallas_src>
import functools

import jax
import jax.numpy as jnp
import numpy as np
from jax.experimental import pallas as pl
from jax.experimental.pallas import tpu as pltpu


_LANE = 128
# Padded logit value: max(z,0)=0, z*y=0 (labels padded with 0), and
# log1p(exp(-|z|)) underflows to exactly 0 -> padded lanes contribute 0 BCE.
_NEG_PAD = -1e9


def _hybrid_loss_kernel(logits_ref, labels_ref, reps_ref, fps_ref, out_ref,
                        *, cls_w, cont_w, inv_temp, n_cls_elems):
    # ---------------- BCEWithLogitsLoss (mean over the TRUE elements) -------
    z = logits_ref[...].astype(jnp.float32)
    y = labels_ref[...].astype(jnp.float32)
    # numerically stable: max(z,0) - z*y + log1p(exp(-|z|))
    bce = jnp.maximum(z, 0.0) - z * y + jnp.log1p(jnp.exp(-jnp.abs(z)))
    cls_loss = jnp.sum(bce) * (1.0 / n_cls_elems)

    # ---------------- ContrastiveLoss (InfoNCE, diagonal targets) -----------
    r = reps_ref[...].astype(jnp.float32)
    f = fps_ref[...].astype(jnp.float32)
    # F.normalize semantics: x / max(||x||, 1e-12) == x * rsqrt(max(||x||^2, 1e-24))
    rn = r * jax.lax.rsqrt(
        jnp.maximum(jnp.sum(r * r, axis=-1, keepdims=True), 1e-24))
    fn = f * jax.lax.rsqrt(
        jnp.maximum(jnp.sum(f * f, axis=-1, keepdims=True), 1e-24))
    # sim[i, j] = <rn_i, fn_j> / T  -- contract last dims on the MXU
    sim = jax.lax.dot_general(rn, fn, (((1,), (1,)), ((), ())),
                              preferred_element_type=jnp.float32) * inv_temp
    b = sim.shape[0]
    m = jnp.max(sim, axis=-1, keepdims=True)
    lse = m + jnp.log(jnp.sum(jnp.exp(sim - m), axis=-1, keepdims=True))
    # diag(sim) computed directly from data already in vregs (no BxB iota/mask)
    diag = jnp.sum(rn * fn, axis=-1, keepdims=True) * inv_temp
    cont_loss = jnp.sum(lse - diag) * (1.0 / float(b))

    total = cls_w * cls_loss + cont_w * cont_loss
    out_ref[0] = total
    out_ref[1] = cls_loss
    out_ref[2] = cont_loss


def _pad_lanes(x, pad_value=0.0):
    """Pad the last (lane) dim to a multiple of 128."""
    pad = (-x.shape[-1]) % _LANE
    if pad:
        x = jnp.pad(x, ((0, 0), (0, pad)), constant_values=pad_value)
    return x


def hybrid_loss(logits, labels, representations, fingerprints,
                classification_weight=1.0, contrastive_weight=0.1,
                temperature=0.1):
    B, C = logits.shape

    # Lane-dense layouts: padded BCE lanes contribute exactly 0 (see _NEG_PAD);
    # zero-padded embedding lanes leave norms and dot products unchanged.
    logits_p = _pad_lanes(logits.astype(jnp.float32), _NEG_PAD)
    labels_p = _pad_lanes(labels.astype(jnp.float32), 0.0)
    reps_p = _pad_lanes(representations.astype(jnp.float32), 0.0)
    fps_p = _pad_lanes(fingerprints.astype(jnp.float32), 0.0)

    kernel = functools.partial(
        _hybrid_loss_kernel,
        cls_w=float(classification_weight),
        cont_w=float(contrastive_weight),
        inv_temp=1.0 / float(temperature),
        n_cls_elems=float(B * C),           # true (unpadded) element count
    )

    out = pl.pallas_call(
        kernel,
        out_shape=jax.ShapeDtypeStruct((3,), jnp.float32),
        # Grid-less call: whole arrays as single VMEM blocks -> no double
        # buffering, no pipeline bookkeeping.
        in_specs=[pl.BlockSpec(memory_space=pltpu.MemorySpace.VMEM)
                  for _ in range(4)],
        # Single collapsed scalar output in SMEM.
        out_specs=pl.BlockSpec(memory_space=pltpu.MemorySpace.SMEM),
    )(logits_p, labels_p, reps_p, fps_p)

    return out[0], out[1], out[2]


def _reference(logits, labels, reps, fps, cls_w=1.0, cont_w=0.1, temp=0.1):
    z = logits.astype(jnp.float32)
    y = labels.astype(jnp.float32)
    bce = jnp.maximum(z, 0.0) - z * y + jnp.log1p(jnp.exp(-jnp.abs(z)))
    cls_loss = jnp.mean(bce)
    rn = reps / jnp.maximum(jnp.linalg.norm(reps, axis=-1, keepdims=True), 1e-12)
    fn = fps / jnp.maximum(jnp.linalg.norm(fps, axis=-1, keepdims=True), 1e-12)
    sim = rn @ fn.T / temp
    lse = jax.scipy.special.logsumexp(sim, axis=-1)
    cont_loss = jnp.mean(lse - jnp.diag(sim))
    return cls_w * cls_loss + cont_w * cont_loss, cls_loss, cont_loss


if __name__ == "__main__":
    key = jax.random.PRNGKey(0)
    k1, k2, k3, k4 = jax.random.split(key, 4)

    B, C, D = 8, 16, 32          # batch, num classification tasks, embedding dim
    logits = jax.random.normal(k1, (B, C), dtype=jnp.float32)
    labels = jax.random.bernoulli(k2, 0.5, (B, C)).astype(jnp.float32)
    representations = jax.random.normal(k3, (B, D), dtype=jnp.float32)
    fingerprints = jax.random.normal(k4, (B, D), dtype=jnp.float32)

    total, cls_l, cont_l = hybrid_loss(logits, labels, representations,
                                       fingerprints)
    jax.block_until_ready((total, cls_l, cont_l))

    ref_total, ref_cls, ref_cont = _reference(logits, labels, representations,
                                              fingerprints)
    np.testing.assert_allclose(np.asarray(total), np.asarray(ref_total),
                               rtol=1e-5, atol=1e-5)
    np.testing.assert_allclose(np.asarray(cls_l), np.asarray(ref_cls),
                               rtol=1e-5, atol=1e-5)
    np.testing.assert_allclose(np.asarray(cont_l), np.asarray(ref_cont),
                               rtol=1e-5, atol=1e-5)

    print("KERNEL_OK")
</pallas_src>

<mosaic_0001>
module attributes {stable_mosaic.version = 11 : i64} {
  func.func @_hybrid_loss_kernel(%arg0: memref<8x128xf32, #tpu.memory_space<vmem>>, %arg1: memref<8x128xf32, #tpu.memory_space<vmem>>, %arg2: memref<8x128xf32, #tpu.memory_space<vmem>>, %arg3: memref<8x128xf32, #tpu.memory_space<vmem>>, %arg4: memref<3xf32, #tpu.memory_space<smem>>) attributes {dimension_semantics = [], scalar_prefetch = 0 : i64, scratch_operands = 0 : i64, tpu.core_type = #tpu.core_type<tc>} {
    %c0 = arith.constant 0 : index
    %c0_0 = arith.constant 0 : index
    %0 = vector.load %arg0[%c0, %c0_0] : memref<8x128xf32, #tpu.memory_space<vmem>>, vector<8x128xf32>
    %c0_1 = arith.constant 0 : index
    %c0_2 = arith.constant 0 : index
    %1 = vector.load %arg1[%c0_1, %c0_2] : memref<8x128xf32, #tpu.memory_space<vmem>>, vector<8x128xf32>
    %cst = arith.constant 0.000000e+00 : f32
    %2 = vector.broadcast %cst : f32 to vector<8x128xf32>
    %3 = arith.maximumf %0, %2 : vector<8x128xf32>
    %4 = arith.mulf %0, %1 : vector<8x128xf32>
    %5 = arith.subf %3, %4 : vector<8x128xf32>
    %6 = math.absf %0 : vector<8x128xf32>
    %cst_3 = arith.constant 0.000000e+00 : f32
    %7 = vector.broadcast %cst_3 : f32 to vector<8x128xf32>
    %8 = arith.subf %7, %6 : vector<8x128xf32>
    %9 = math.exp %8 : vector<8x128xf32>
    %10 = math.log1p %9 : vector<8x128xf32>
    %11 = arith.addf %5, %10 : vector<8x128xf32>
    %12 = vector.shape_cast %11 : vector<8x128xf32> to vector<1x8x128xf32>
    %cst_4 = arith.constant dense<0.000000e+00> : vector<1xf32>
    %13 = vector.multi_reduction <add>, %12, %cst_4 [1, 2] : vector<1x8x128xf32> to vector<1xf32>
    %14 = vector.shape_cast %13 : vector<1xf32> to vector<1x1x1xf32>
    %15 = vector.extract %14[0, 0, 0] : f32 from vector<1x1x1xf32>
    %cst_5 = arith.constant 7.812500e-03 : f32
    %16 = arith.mulf %15, %cst_5 : f32
    %c0_6 = arith.constant 0 : index
    %c0_7 = arith.constant 0 : index
    %17 = vector.load %arg2[%c0_6, %c0_7] : memref<8x128xf32, #tpu.memory_space<vmem>>, vector<8x128xf32>
    %c0_8 = arith.constant 0 : index
    %c0_9 = arith.constant 0 : index
    %18 = vector.load %arg3[%c0_8, %c0_9] : memref<8x128xf32, #tpu.memory_space<vmem>>, vector<8x128xf32>
    %19 = arith.mulf %17, %17 : vector<8x128xf32>
    %cst_10 = arith.constant dense<0.000000e+00> : vector<8xf32>
    %20 = vector.multi_reduction <add>, %19, %cst_10 [1] : vector<8x128xf32> to vector<8xf32>
    %21 = vector.shape_cast %20 : vector<8xf32> to vector<8x1xf32>
    %cst_11 = arith.constant 1.000000e-24 : f32
    %22 = vector.broadcast %cst_11 : f32 to vector<8x1xf32>
    %23 = arith.maximumf %21, %22 : vector<8x1xf32>
    %24 = math.rsqrt %23 : vector<8x1xf32>
    %25 = vector.broadcast %24 : vector<8x1xf32> to vector<8x128xf32>
    %26 = arith.mulf %17, %25 : vector<8x128xf32>
    %27 = arith.mulf %18, %18 : vector<8x128xf32>
    %cst_12 = arith.constant dense<0.000000e+00> : vector<8xf32>
    %28 = vector.multi_reduction <add>, %27, %cst_12 [1] : vector<8x128xf32> to vector<8xf32>
    %29 = vector.shape_cast %28 : vector<8xf32> to vector<8x1xf32>
    %cst_13 = arith.constant 1.000000e-24 : f32
    %30 = vector.broadcast %cst_13 : f32 to vector<8x1xf32>
    %31 = arith.maximumf %29, %30 : vector<8x1xf32>
    %32 = math.rsqrt %31 : vector<8x1xf32>
    %33 = vector.broadcast %32 : vector<8x1xf32> to vector<8x128xf32>
    %34 = arith.mulf %18, %33 : vector<8x128xf32>
    %cst_14 = arith.constant dense<0.000000e+00> : vector<8x8xf32>
    %35 = tpu.matmul %26, %34, %cst_14 {dimension_numbers = #tpu.dot_dimension_numbers<[1], [1], [0], [0], [0, 0, 1, 0], [], []>} : vector<8x128xf32>, vector<8x128xf32>, vector<8x8xf32> -> vector<8x8xf32>
    %cst_15 = arith.constant 1.000000e+01 : f32
    %36 = vector.broadcast %cst_15 : f32 to vector<8x8xf32>
    %37 = arith.mulf %35, %36 : vector<8x8xf32>
    %cst_16 = arith.constant dense<0xFF800000> : vector<8xf32>
    %38 = vector.multi_reduction <maximumf>, %37, %cst_16 [1] : vector<8x8xf32> to vector<8xf32>
    %39 = vector.shape_cast %38 : vector<8xf32> to vector<8x1xf32>
    %40 = vector.broadcast %39 : vector<8x1xf32> to vector<8x8xf32>
    %41 = arith.subf %37, %40 : vector<8x8xf32>
    %42 = math.exp %41 : vector<8x8xf32>
    %cst_17 = arith.constant dense<0.000000e+00> : vector<8xf32>
    %43 = vector.multi_reduction <add>, %42, %cst_17 [1] : vector<8x8xf32> to vector<8xf32>
    %44 = vector.shape_cast %43 : vector<8xf32> to vector<8x1xf32>
    %45 = math.log %44 : vector<8x1xf32>
    %46 = arith.addf %39, %45 : vector<8x1xf32>
    %47 = arith.mulf %26, %34 : vector<8x128xf32>
    %cst_18 = arith.constant dense<0.000000e+00> : vector<8xf32>
    %48 = vector.multi_reduction <add>, %47, %cst_18 [1] : vector<8x128xf32> to vector<8xf32>
    %49 = vector.shape_cast %48 : vector<8xf32> to vector<8x1xf32>
    %cst_19 = arith.constant 1.000000e+01 : f32
    %50 = vector.broadcast %cst_19 : f32 to vector<8x1xf32>
    %51 = arith.mulf %49, %50 : vector<8x1xf32>
    %52 = arith.subf %46, %51 : vector<8x1xf32>
    %53 = vector.shape_cast %52 : vector<8x1xf32> to vector<1x8x1xf32>
    %cst_20 = arith.constant dense<0.000000e+00> : vector<1xf32>
    %54 = vector.multi_reduction <add>, %53, %cst_20 [1, 2] : vector<1x8x1xf32> to vector<1xf32>
    %55 = vector.shape_cast %54 : vector<1xf32> to vector<1x1x1xf32>
    %56 = vector.extract %55[0, 0, 0] : f32 from vector<1x1x1xf32>
    %cst_21 = arith.constant 1.250000e-01 : f32
    %57 = arith.mulf %56, %cst_21 : f32
    %cst_22 = arith.constant 1.000000e+00 : f32
    %58 = arith.mulf %cst_22, %16 : f32
    %cst_23 = arith.constant 1.000000e-01 : f32
    %59 = arith.mulf %cst_23, %57 : f32
    %60 = arith.addf %58, %59 : f32
    %c0_24 = arith.constant 0 : index
    %61 = memref.load %arg4[%c0_24] : memref<3xf32, #tpu.memory_space<smem>>
    memref.store %60, %arg4[%c0_24] : memref<3xf32, #tpu.memory_space<smem>>
    %c1 = arith.constant 1 : index
    %62 = memref.load %arg4[%c1] : memref<3xf32, #tpu.memory_space<smem>>
    memref.store %16, %arg4[%c1] : memref<3xf32, #tpu.memory_space<smem>>
    %c2 = arith.constant 2 : index
    %63 = memref.load %arg4[%c2] : memref<3xf32, #tpu.memory_space<smem>>
    memref.store %57, %arg4[%c2] : memref<3xf32, #tpu.memory_space<smem>>
    return
  }
}

</mosaic_0001>

<llo_original>
// kernel: tpu_custom_call.1
$region0: #{tpu_custom_call.1}
  #allocation0 [shape = 'u32[]', space=smem, size = 0x4, offset = 0x4, fixed_abs, tag = 'smem constant byte address 0x4 - core index']
  #allocation1 [shape = 'u32[144,128]{1,0:T(1,128)}', space=vmem, size = 0x12000, scoped, tag = 'internal scratch']
  %s0 = inlined_call_operand.hbm [shape: f32[8,128], index: 0, kind: input, shape index: {}]
  %s1 = inlined_call_operand.hbm [shape: f32[8,128], index: 1, kind: input, shape index: {}]
  %s2 = inlined_call_operand.hbm [shape: f32[8,128], index: 2, kind: input, shape index: {}]
  %s3 = inlined_call_operand.vmem [shape: f32[8,128], index: 3, kind: input, shape index: {}]
  %s4 = inlined_call_operand.hbm [shape: f32[3], index: 4, kind: output, shape index: {}]
  %s5 = sld [smem:[#allocation0]]
  $region38: #{tpu_custom_call.1} parent=0
    _
  %s7 = ssub.s32 1, %s5
  %s8 = scalar_select 0, %s7, %s5
  $region1: #{tpu_custom_call.1} parent=0
    #allocation2 [shape = 'u8[4096]{0}', space=vmem, size = 0x1000, scoped, tag = 'input window, operand 0, single buffered']
    #allocation3 [shape = 's32[1]{0}', space=sflag, size = 0x4, scoped, tag = 'scoped memory for tpu_custom_call.1']
    #allocation4 [shape = 's32[1]{0}', space=sflag, size = 0x4, scoped, tag = 'scoped memory for tpu_custom_call.1']
    #allocation5 [shape = 'u8[4096]{0}', space=vmem, size = 0x1000, scoped, tag = 'input window, operand 1, single buffered']
    #allocation6 [shape = 's32[1]{0}', space=sflag, size = 0x4, scoped, tag = 'scoped memory for tpu_custom_call.1']
    #allocation7 [shape = 'u8[4096]{0}', space=vmem, size = 0x1000, scoped, tag = 'input window, operand 2, single buffered']
    #allocation8 [shape = 'u8[512]{0}', space=smem, size = 0x200, scoped, tag = 'output window, operand 0, single buffered']
    %9 = vsyncpa [#allocation3], 0
    %10 = vsyncpa [#allocation6], 0
    %11 = vsyncpa [#allocation4], 0
    // Predicated region
    $region2: #{tpu_custom_call.1} parent=1 // pred_check
      _
    $region3: #{tpu_custom_call.1} parent=1 // pred_check_branch
      %13 = sbr.rel (0) target = $region5
    $region4: #{tpu_custom_call.1} parent=1 // pred_region
      %s15 = ssub.s32 128, 128
      %16 = vsyncadd [#allocation3], %s15
      %s18 = sshll.u32 [#allocation2], 4
      %s19 = int_to_ptr.vmem [resolvable:$true] %s18
      %21 = dma.hbm_to_vmem [thread:$0]  %s0, 128, %s19, [#allocation3]
    $region5: #{tpu_custom_call.1} parent=1 // pred_fallthru
      _
    // Predicated region
    $region6: #{tpu_custom_call.1} parent=1 // pred_check
      _
    $region7: #{tpu_custom_call.1} parent=1 // pred_check_branch
      %23 = sbr.rel (0) target = $region9
    $region8: #{tpu_custom_call.1} parent=1 // pred_region
      %s25 = ssub.s32 128, 128
      %26 = vsyncadd [#allocation6], %s25
      %s28 = sshll.u32 [#allocation5], 4
      %s29 = int_to_ptr.vmem [resolvable:$true] %s28
      %31 = dma.hbm_to_vmem [thread:$0]  %s1, 128, %s29, [#allocation6]
    $region9: #{tpu_custom_call.1} parent=1 // pred_fallthru
      _
    // Predicated region
    $region10: #{tpu_custom_call.1} parent=1 // pred_check
      _
    $region11: #{tpu_custom_call.1} parent=1 // pred_check_branch
      %33 = sbr.rel (0) target = $region13
    $region12: #{tpu_custom_call.1} parent=1 // pred_region
      %s35 = ssub.s32 128, 128
      %36 = vsyncadd [#allocation6], %s35
      %s38 = sshll.u32 [#allocation7], 4
      %s39 = int_to_ptr.vmem [resolvable:$true] %s38
      %41 = dma.hbm_to_vmem [thread:$0]  %s2, 128, %s39, [#allocation6]
    $region13: #{tpu_custom_call.1} parent=1 // pred_fallthru
      _
    // Predicated region
    $region14: #{tpu_custom_call.1} parent=1 // pred_check
      _
    $region15: #{tpu_custom_call.1} parent=1 // pred_check_branch
      %43 = sbr.rel (0) target = $region17
    $region16: #{tpu_custom_call.1} parent=1 // pred_region
      _
    $region17: #{tpu_custom_call.1} parent=1 // pred_fallthru
      _
    // Predicated region
    $region18: #{tpu_custom_call.1} parent=1 // pred_check
      _
    $region19: #{tpu_custom_call.1} parent=1 // pred_check_branch
      %45 = sbr.rel (0) target = $region21
    $region20: #{tpu_custom_call.1} parent=1 // pred_region
      %46 = dma.done [#allocation3], 128
    $region21: #{tpu_custom_call.1} parent=1 // pred_fallthru
      _
    // Predicated region
    $region22: #{tpu_custom_call.1} parent=1 // pred_check
      _
    $region23: #{tpu_custom_call.1} parent=1 // pred_check_branch
      %48 = sbr.rel (0) target = $region25
    $region24: #{tpu_custom_call.1} parent=1 // pred_region
      %49 = dma.done [#allocation6], 128
    $region25: #{tpu_custom_call.1} parent=1 // pred_fallthru
      _
    // Predicated region
    $region26: #{tpu_custom_call.1} parent=1 // pred_check
      _
    $region27: #{tpu_custom_call.1} parent=1 // pred_check_branch
      %51 = sbr.rel (0) target = $region29
    $region28: #{tpu_custom_call.1} parent=1 // pred_region
      %52 = dma.done [#allocation6], 128
    $region29: #{tpu_custom_call.1} parent=1 // pred_fallthru
      _
    %v53 = vld [vmem:[#allocation2] sm:$0xff]
    %v54 = vld [vmem:[#allocation5] sm:$0xff]
    %v55 = vmax.f32 %v53, 0.0
    %v56 = vmul.f32 %v53, %v54
    %v57 = vsub.f32 %v55, %v56
    %v58 = vand.u32 2147483647, %v53
    %v59 = vsub.f32 0.0, %v58
    %v60 = vmul.f32 %v59, 1.442695
    %v61 = vpow.pop %v60
    %v62 = vadd.f32 %v61, 1.0
    %v63 = vlog2.pop %v62
    %v64 = vmul.f32 %v63, 0.6931472
    %v65 = vmul.f32 -0.5, %v61
    %v66 = vadd.f32 %v65, 1.0
    %v67 = vmul.f32 %v66, %v61
    %v68 = vand.u32 2147483647, %v61
    %vm69 = vcmp.lt.f32.partialorder %v68, 0.0004427343
    %v70 = vsel %vm69, %v67, %v64
    %v71 = vadd.f32 %v57, %v70
    %72 = vadd.xlane.f32.xlu0 %v71
    %v73 = vpop.xlane.xlu0 %72
    %v74 = vrot.slane %v73, 4
    %v75 = vadd.f32 %v73, %v74
    %v76 = vrot.slane %v75, 2
    %v77 = vadd.f32 %v75, %v76
    %v78 = vrot.slane %v77, 1
    %v79 = vadd.f32 %v77, %v78
    %s80 = vtos %v79
    %s81 = smul.f32 %s80, 0.0078125
    %v82 = vld [vmem:[#allocation7] sm:$0xff]
    %v83 = vld [vmem:[%s3] sm:$0xff]
    %v84 = vmul.f32 %v82, %v82
    %85 = vadd.xlane.f32.xlu0 %v84
    %v86 = vpop.xlane.xlu0 %85
    %v87 = vmax.f32 %v86, 1e-24
    %v88 = vrsqrt.pop %v87
    %v89 = vmul.f32 %v82, %v88
    %v90 = vmul.f32 %v83, %v83
    %91 = vadd.xlane.f32.xlu0 %v90
    %v92 = vpop.xlane.xlu0 %91
    %v93 = vmax.f32 %v92, 1e-24
    %v94 = vrsqrt.pop %v93
    %v95 = vmul.f32 %v83, %v94
    %96 = vmatprep.subr.mxu0 0.0
    %97 = vmatpush1.xpose.msra.mxu0 %v95
    %98 = vmatprep.subr.mxu0 0.0
    %99 = vmatpush1.xpose.msra.mxu0 0.0
    %100 = vmatprep.subr.mxu0 0.0
    %101 = vmatpush1.xpose.msra.mxu0 0.0
    %102 = vmatprep.subr.mxu0 0.0
    %103 = vmatpush1.xpose.msra.mxu0 0.0
    %104 = vmatprep.subr.mxu0 0.0
    %105 = vmatpush1.xpose.msra.mxu0 0.0
    %106 = vmatprep.subr.mxu0 0.0
    %107 = vmatpush1.xpose.msra.mxu0 0.0
    %108 = vmatprep.subr.mxu0 0.0
    %109 = vmatpush1.xpose.msra.mxu0 0.0
    %110 = vmatprep.subr.mxu0 0.0
    %111 = vmatpush1.xpose.msra.mxu0 0.0
    %112 = vmatprep.subr.mxu0 0.0
    %113 = vmatpush1.xpose.msra.mxu0 0.0
    %114 = vmatprep.subr.mxu0 0.0
    %115 = vmatpush1.xpose.msra.mxu0 0.0
    %116 = vmatprep.subr.mxu0 0.0
    %117 = vmatpush1.xpose.msra.mxu0 0.0
    %118 = vmatprep.subr.mxu0 0.0
    %119 = vmatpush1.xpose.msra.mxu0 0.0
    %120 = vmatprep.subr.mxu0 0.0
    %121 = vmatpush1.xpose.msra.mxu0 0.0
    %122 = vmatprep.subr.mxu0 0.0
    %123 = vmatpush1.xpose.msra.mxu0 0.0
    %124 = vmatprep.subr.mxu0 0.0
    %125 = vmatpush1.xpose.msra.mxu0 0.0
    %126 = vmatprep.subr.mxu0 0.0
    %127 = vmatpush1.xpose.msra.mxu0 0.0
    %128 = vmatprep.subr.mxu0 0.0
    %129 = vmatpush1.xpose.msra.mxu0 0.0
    %130 = vmatprep.subr.mxu0 0.0
    %131 = vmatpush1.xpose.msra.mxu0 0.0
    %132 = vmatprep.subr.mxu0 0.0
    %133 = vmatpush1.xpose.msra.mxu0 0.0
    %134 = vmatprep.subr.mxu0 0.0
    %135 = vmatpush1.xpose.msra.mxu0 0.0
    %136 = vmatprep.subr.mxu0 0.0
    %137 = vmatpush1.xpose.msra.mxu0 0.0
    %138 = vmatprep.subr.mxu0 0.0
    %139 = vmatpush1.xpose.msra.mxu0 0.0
    %140 = vmatprep.subr.mxu0 0.0
    %141 = vmatpush1.xpose.msra.mxu0 0.0
    %142 = vmatprep.subr.mxu0 0.0
    %143 = vmatpush1.xpose.msra.mxu0 0.0
    %144 = vmatprep.subr.mxu0 0.0
    %145 = vmatpush1.xpose.msra.mxu0 0.0
    %146 = vmatprep.subr.mxu0 0.0
    %147 = vmatpush1.xpose.msra.mxu0 0.0
    %148 = vmatprep.subr.mxu0 0.0
    %149 = vmatpush1.xpose.msra.mxu0 0.0
    %150 = vmatprep.subr.mxu0 0.0
    %151 = vmatpush1.xpose.msra.mxu0 0.0
    %152 = vmatprep.subr.mxu0 0.0
    %153 = vmatpush1.xpose.msra.mxu0 0.0
    %154 = vmatprep.subr.mxu0 0.0
    %155 = vmatpush1.xpose.msra.mxu0 0.0
    %156 = vmatprep.subr.mxu0 0.0
    %157 = vmatpush1.xpose.msra.mxu0 0.0
    %158 = vmatprep.subr.mxu0 0.0
    %159 = vmatpush1.xpose.msra.mxu0 0.0
    %160 = vmatprep.mubr.f32.mxu0 0.0
    %161 = vmatmul.mubr.f32.gmra.mrb[0].mxu0 %v89
    %v162 = vpop.f32.mrb[0].mxu0
    %v163 = vadd.f32 0.0, %v162
    %v164 = vpop.f32.mrb[0].mxu0
    %165 = vdwg.mxu0
    %v166 = vmul.f32 %v163, 10.0
    %vm167 = vcmask 64512
    %v168 = vsel %vm167, %v166, -inf
    %169 = vmax.xlane.f32.xlu0 %v168
    %v170 = vpop.xlane.xlu0 %169
    %v171 = vsub.f32 %v166, %v170
    %v172 = vmul.f32 %v171, 1.442695
    %v173 = vpow.pop %v172
    %v174 = vsel %vm167, %v173, 0.0
    %175 = vadd.xlane.f32.xlu0 %v174
    %v176 = vpop.xlane.xlu0 %175
    %v177 = vlog2.pop %v176
    %v178 = vmul.f32 %v177, 0.6931472
    %v179 = vadd.f32 %v170, %v178
    %v180 = vmul.f32 %v89, %v95
    %181 = vadd.xlane.f32.xlu0 %v180
    %v182 = vpop.xlane.xlu0 %181
    %v183 = vmul.f32 %v182, 10.0
    %v184 = vsub.f32 %v179, %v183
    %vm185 = vcmask 7168
    %v186 = vsel %vm185, %v184, 0.0
    %187 = vadd.xlane.f32.xlu0 %v186
    %v188 = vpop.xlane.xlu0 %187
    %v189 = vrot.slane %v188, 4
    %v190 = vadd.f32 %v188, %v189
    %v191 = vrot.slane %v190, 2
    %v192 = vadd.f32 %v190, %v191
    %v193 = vrot.slane %v192, 1
    %v194 = vadd.f32 %v192, %v193
    %s195 = vtos %v194
    %s196 = smul.f32 %s195, 0.125
    %s197 = smul.f32 %s196, 0.1
    %s198 = sadd.f32 %s81, %s197
    %s199 = scalar_lea.smem [#allocation8], 0
    %200 = sst [smem:[%s199]] %s198
    %s201 = scalar_lea.smem [#allocation8], 1
    %202 = sst [smem:[%s201]] %s81
    %s203 = scalar_lea.smem [#allocation8], 2
    %204 = sst [smem:[%s203]] %s196
    // Predicated region
    $region30: #{tpu_custom_call.1} parent=1 // pred_check
      _
    $region31: #{tpu_custom_call.1} parent=1 // pred_check_branch
      %206 = sbr.rel (0) target = $region33
    $region32: #{tpu_custom_call.1} parent=1 // pred_region
      %s208 = ssub.s32 16, 16
      %209 = vsyncadd [#allocation4], %s208
      %212 = dma.smem_to_hbm [#allocation8], 16, %s4, [#allocation4]
    $region33: #{tpu_custom_call.1} parent=1 // pred_fallthru
      _
    // Predicated region
    $region34: #{tpu_custom_call.1} parent=1 // pred_check
      _
    $region35: #{tpu_custom_call.1} parent=1 // pred_check_branch
      %214 = sbr.rel (0) target = $region37
    $region36: #{tpu_custom_call.1} parent=1 // pred_region
      %215 = dma.done [#allocation4], 16
    $region37: #{tpu_custom_call.1} parent=1 // pred_fallthru
      _
    %216 = sfence
    %217 = vsyncpa [#allocation3], 1
    %218 = vsyncpa [#allocation6], 1
    %219 = vsyncpa [#allocation4], 1

</llo_original>
